<compile_context>
chip_gen: v7x
topology: tpu7x:2x2x1
jax: 0.10.0
libtpu: 0.0.40
codegen_flags: <defaults>
</compile_context>

<pallas_src>
import math
from functools import partial

import jax
import jax.numpy as jnp
from jax.experimental import pallas as pl
from jax.experimental.pallas import tpu as pltpu

# ---------------- config (small, consistent with the module) ----------------
B = 16           # batch
W = 16           # window_size
C = 32           # num_features
H = 64           # hidden width of the synthetic inner model
HP = 128         # lane-padded hidden width
DC = 16          # cond dim
TM = 128         # rows per grid step (MXU M-tile)
NUM_CLEAN = 2
NUM_STEPS = 10
INIT_PROB = 0.1
MIN_SNR_GAMMA = 5.0
# pred_objective = 'v', min_snr_loss_weight = True


# ---------------- plain-JAX schedule glue (tiny (B, W) arrays) ----------------
def alpha_cosine_log_snr(t, s=0.008):
    val = jnp.cos((t + s) / (1 + s) * math.pi * 0.5) ** (-2) - 1.0
    return -jnp.log(jnp.maximum(val, 1e-5))


def init_t(t, window_size, num_clean):
    w = jnp.arange(window_size, dtype=jnp.float32)
    t_k = jnp.clip(w - (num_clean - 1), 0.0, float(window_size))
    t_k = t_k / float(window_size - num_clean)
    t_k = t_k[None, :] + t[:, None]
    return jnp.clip(t_k, 0.0, 1.0)


# ---------------- Pallas kernel (one row-tile of TM rows per grid step) -------
def _loss_kernel(slab_ref, beff_ref, w1_ref, w2_ref, b2_ref, out_ref,
                 *, tm, inv_n, min_snr_gamma):
    # slab block: (1, 3*TM, C) f32 = [x_start ; noise ; log_snr (lane-bcast)]
    xs = slab_ref[0, 0:tm, :]          # (TM, C)
    ns = slab_ref[0, tm:2 * tm, :]     # (TM, C)
    lsr = slab_ref[0, 2 * tm:3 * tm, :]  # (TM, C) log_snr already broadcast

    # ---- schedule math (single exp; exact reciprocal; all lane-dense) ----
    snr = jnp.exp(lsr)                                   # (TM, C)
    inv_sp1 = 1.0 / (snr + 1.0)                          # = sigmoid(-log_snr)
    alpha = jnp.sqrt(snr * inv_sp1)                      # = sqrt(sigmoid(log_snr))
    sigma = jnp.sqrt(inv_sp1)

    # ---- q_sample ----
    x = xs * alpha + ns * sigma                          # (TM, C) f32

    # ---- inner model: 2-layer MLP; conditioning pre-folded into beff ----
    h = jnp.dot(x.astype(jnp.bfloat16), w1_ref[...],
                preferred_element_type=jnp.float32)      # (TM, HP)
    h = jnp.tanh(h + beff_ref[0])                        # f32, lane-dense HP=128
    pred = jnp.dot(h.astype(jnp.bfloat16), w2_ref[...],
                   preferred_element_type=jnp.float32) + b2_ref[...]   # (TM, C)

    # ---- v-objective target, per-element weighted squared error ----
    target = alpha * ns - sigma * xs
    diff = pred - target
    lw = jnp.minimum(snr, min_snr_gamma) * inv_sp1       # min-SNR weight (bcast)
    wsq = diff * diff * lw

    # ---- partial loss for this row tile (already globally normalized) ----
    part = jnp.sum(jnp.sum(wsq, axis=1, keepdims=True),
                   axis=0, keepdims=True) * inv_n        # (1, 1)
    out_ref[0] = part


def rolling_diffusion_loss(x_start, noise, log_snr, cond, params, *, tm=TM):
    b, w, c = x_start.shape
    h = params["w1"].shape[-1]
    hp = HP
    r = b * w
    assert r % tm == 0, "row count must be a multiple of the row tile"
    g = r // tm

    # --- conditioning folded into a per-row effective first-layer bias ---
    b1_eff = (params["b1"]
              + cond @ params["wc"]
              + log_snr[:, 0:1] * params["tproj"])        # (B, H)
    b1_eff = jnp.pad(b1_eff, ((0, 0), (0, hp - h)))       # (B, HP), pad lanes = 0
    beff = jnp.broadcast_to(b1_eff[:, None, :], (b, w, hp)).reshape(g, tm, hp)

    # --- lane-padded bf16 MXU weights (zero padding is exact) ---
    w1p = jnp.pad(params["w1"], ((0, 0), (0, hp - h))).astype(jnp.bfloat16)  # (C, HP)
    w2p = jnp.pad(params["w2"], ((0, hp - h), (0, 0))).astype(jnp.bfloat16)  # (HP, C)

    # --- merged activation slab per row tile: [x_start ; noise ; log_snr] ---
    xs = x_start.reshape(g, tm, c)
    ns = noise.reshape(g, tm, c)
    ls = jnp.broadcast_to(log_snr.reshape(r, 1), (r, c)).reshape(g, tm, c)
    slab = jnp.concatenate([xs, ns, ls], axis=1)          # (G, 3*TM, C) f32

    kernel = partial(_loss_kernel, tm=tm, inv_n=1.0 / float(r * c),
                     min_snr_gamma=MIN_SNR_GAMMA)

    partials = pl.pallas_call(
        kernel,
        out_shape=jax.ShapeDtypeStruct((g, 1, 1), jnp.float32),
        grid_spec=pltpu.PrefetchScalarGridSpec(
            num_scalar_prefetch=0,
            grid=(g,),
            in_specs=[
                pl.BlockSpec((1, 3 * tm, c), lambda i: (i, 0, 0)),  # merged slab
                pl.BlockSpec((1, tm, hp), lambda i: (i, 0, 0)),     # b1_eff rows
                pl.BlockSpec((c, hp), lambda i: (0, 0)),            # w1 (resident)
                pl.BlockSpec((hp, c), lambda i: (0, 0)),            # w2 (resident)
                pl.BlockSpec((1, c), lambda i: (0, 0)),             # b2 (resident)
            ],
            out_specs=pl.BlockSpec((1, 1, 1), lambda i: (i, 0, 0)),  # partial loss
        ),
        compiler_params=pltpu.CompilerParams(
            dimension_semantics=("parallel",)),
    )(slab, beff, w1p, w2p, params["b2"])
    return jnp.sum(partials)


# ---------------- pure-JAX f32 reference (for correctness check) ----------------
def reference_loss(x_start, noise, log_snr, cond, params):
    lsnr = log_snr[..., None]
    alpha = jnp.sqrt(jax.nn.sigmoid(lsnr))
    sigma = jnp.sqrt(jax.nn.sigmoid(-lsnr))
    x = x_start * alpha + noise * sigma
    t0 = log_snr[:, 0]
    h = (jnp.einsum("bwc,ch->bwh", x, params["w1"])
         + t0[:, None, None] * params["tproj"][None]
         + jnp.einsum("bd,dh->bh", cond, params["wc"])[:, None, :]
         + params["b1"][None])
    h = jnp.tanh(h)
    pred = jnp.einsum("bwh,hc->bwc", h, params["w2"]) + params["b2"][None]
    target = alpha * noise - sigma * x_start
    loss = jnp.mean((pred - target) ** 2, axis=-1)
    snr = jnp.exp(log_snr)
    lw = jnp.minimum(snr, MIN_SNR_GAMMA) / (snr + 1.0)
    return jnp.mean(loss * lw)


if __name__ == "__main__":
    key = jax.random.PRNGKey(0)
    keys = jax.random.split(key, 11)

    # forward() stochastic inputs (torch RNG -> jax.random glue)
    times = jax.random.uniform(keys[0], (B,), dtype=jnp.float32)
    noise = jax.random.normal(keys[1], (B, W, C), dtype=jnp.float32)
    mask_u = jax.random.uniform(keys[2], (B,), dtype=jnp.float32)
    action = jax.random.uniform(keys[3], (B, W, C), dtype=jnp.float32,
                                minval=-1.0, maxval=1.0)
    cond = jax.random.normal(keys[4], (B, DC), dtype=jnp.float32)

    # deterministic synthetic inner-model parameters
    params = {
        "w1": jax.random.normal(keys[5], (C, H), jnp.float32) * (1.0 / math.sqrt(C)),
        "b1": jax.random.normal(keys[6], (1, H), jnp.float32) * 0.02,
        "tproj": jax.random.normal(keys[7], (1, H), jnp.float32) * 0.02,
        "wc": jax.random.normal(keys[8], (DC, H), jnp.float32) * (1.0 / math.sqrt(DC)),
        "w2": jax.random.normal(keys[9], (H, C), jnp.float32) * (1.0 / math.sqrt(H)),
        "b2": jax.random.normal(keys[10], (1, C), jnp.float32) * 0.02,
    }

    # p_losses time blending (glue)
    init_times = init_t(times, W, NUM_CLEAN)                                  # (B, W)
    steps = jnp.linspace(1.0, 0.0, NUM_STEPS)
    window_times = init_t(steps[NUM_STEPS - 2:NUM_STEPS - 1], W, NUM_CLEAN)   # (1, W)
    mask = (mask_u < INIT_PROB).astype(jnp.float32)[:, None]                  # (B, 1)
    blended_times = init_times * mask + window_times * (1.0 - mask)           # (B, W)
    log_snr = alpha_cosine_log_snr(blended_times)                             # (B, W)

    loss = rolling_diffusion_loss(action, noise, log_snr, cond, params)
    loss = jax.block_until_ready(loss)

    ref = reference_loss(action, noise, log_snr, cond, params)
    assert jnp.isfinite(loss), "kernel produced non-finite loss"
    # bf16 MXU operands -> slightly looser tolerance vs f32 reference
    assert jnp.allclose(loss, ref, rtol=2e-2, atol=1e-3), (loss, ref)

    print("KERNEL_OK")
</pallas_src>

<mosaic_0001>
module attributes {stable_mosaic.version = 11 : i64} {
  func.func @_loss_kernel(%arg0: i32, %arg1: memref<1x384x32xf32, #tpu.memory_space<vmem>>, %arg2: memref<1x128x128xf32, #tpu.memory_space<vmem>>, %arg3: memref<32x128xbf16, #tpu.memory_space<vmem>>, %arg4: memref<128x32xbf16, #tpu.memory_space<vmem>>, %arg5: memref<1x32xf32, #tpu.memory_space<vmem>>, %arg6: memref<1x1x1xf32, #tpu.memory_space<vmem>>) attributes {dimension_semantics = [#tpu.dimension_semantics<parallel>], iteration_bounds = array<i64: 2>, scalar_prefetch = 0 : i64, scratch_operands = 0 : i64, tpu.core_type = #tpu.core_type<tc>, window_params = [{transform_indices = @transform_0, window_bounds = array<i64: 1, 384, 32>}, {transform_indices = @transform_1, window_bounds = array<i64: 1, 128, 128>}, {pipeline_mode = #tpu.pipeline_mode<synchronous>, transform_indices = @transform_2, window_bounds = array<i64: 32, 128>}, {pipeline_mode = #tpu.pipeline_mode<synchronous>, transform_indices = @transform_3, window_bounds = array<i64: 128, 32>}, {pipeline_mode = #tpu.pipeline_mode<synchronous>, transform_indices = @transform_4, window_bounds = array<i64: 1, 32>}, {transform_indices = @transform_5, window_bounds = array<i64: 1, 1, 1>}]} {
    %c0 = arith.constant 0 : index
    %c0_0 = arith.constant 0 : index
    %c0_1 = arith.constant 0 : index
    %0 = vector.load %arg1[%c0, %c0_0, %c0_1] : memref<1x384x32xf32, #tpu.memory_space<vmem>>, vector<1x128x32xf32>
    %1 = vector.shape_cast %0 : vector<1x128x32xf32> to vector<128x32xf32>
    %c0_2 = arith.constant 0 : index
    %c128 = arith.constant 128 : index
    %c0_3 = arith.constant 0 : index
    %2 = vector.load %arg1[%c0_2, %c128, %c0_3] : memref<1x384x32xf32, #tpu.memory_space<vmem>>, vector<1x128x32xf32>
    %3 = vector.shape_cast %2 : vector<1x128x32xf32> to vector<128x32xf32>
    %c0_4 = arith.constant 0 : index
    %c256 = arith.constant 256 : index
    %c0_5 = arith.constant 0 : index
    %4 = vector.load %arg1[%c0_4, %c256, %c0_5] : memref<1x384x32xf32, #tpu.memory_space<vmem>>, vector<1x128x32xf32>
    %5 = vector.shape_cast %4 : vector<1x128x32xf32> to vector<128x32xf32>
    %6 = math.exp %5 : vector<128x32xf32>
    %cst = arith.constant 1.000000e+00 : f32
    %7 = vector.broadcast %cst : f32 to vector<128x32xf32>
    %8 = arith.addf %6, %7 : vector<128x32xf32>
    %cst_6 = arith.constant 1.000000e+00 : f32
    %9 = vector.broadcast %cst_6 : f32 to vector<128x32xf32>
    %10 = arith.divf %9, %8 : vector<128x32xf32>
    %11 = arith.mulf %6, %10 : vector<128x32xf32>
    %12 = math.sqrt %11 : vector<128x32xf32>
    %13 = math.sqrt %10 : vector<128x32xf32>
    %14 = arith.mulf %1, %12 : vector<128x32xf32>
    %15 = arith.mulf %3, %13 : vector<128x32xf32>
    %16 = arith.addf %14, %15 : vector<128x32xf32>
    %17 = arith.truncf %16 : vector<128x32xf32> to vector<128x32xbf16>
    %c0_7 = arith.constant 0 : index
    %c0_8 = arith.constant 0 : index
    %18 = vector.load %arg3[%c0_7, %c0_8] : memref<32x128xbf16, #tpu.memory_space<vmem>>, vector<32x128xbf16>
    %cst_9 = arith.constant dense<0.000000e+00> : vector<128x128xf32>
    %19 = tpu.matmul %17, %18, %cst_9 {dimension_numbers = #tpu.dot_dimension_numbers<[1], [0], [0], [1], [0, 0, 1, 1], [], []>} : vector<128x32xbf16>, vector<32x128xbf16>, vector<128x128xf32> -> vector<128x128xf32>
    %c0_10 = arith.constant 0 : index
    %c0_11 = arith.constant 0 : index
    %c0_12 = arith.constant 0 : index
    %20 = vector.load %arg2[%c0_10, %c0_11, %c0_12] : memref<1x128x128xf32, #tpu.memory_space<vmem>>, vector<1x128x128xf32>
    %21 = vector.shape_cast %20 : vector<1x128x128xf32> to vector<128x128xf32>
    %22 = arith.addf %19, %21 : vector<128x128xf32>
    %23 = math.tanh %22 : vector<128x128xf32>
    %24 = arith.truncf %23 : vector<128x128xf32> to vector<128x128xbf16>
    %c0_13 = arith.constant 0 : index
    %c0_14 = arith.constant 0 : index
    %25 = vector.load %arg4[%c0_13, %c0_14] : memref<128x32xbf16, #tpu.memory_space<vmem>>, vector<128x32xbf16>
    %cst_15 = arith.constant dense<0.000000e+00> : vector<128x32xf32>
    %26 = tpu.matmul %24, %25, %cst_15 {dimension_numbers = #tpu.dot_dimension_numbers<[1], [0], [0], [1], [0, 0, 1, 1], [], []>} : vector<128x128xbf16>, vector<128x32xbf16>, vector<128x32xf32> -> vector<128x32xf32>
    %c0_16 = arith.constant 0 : index
    %c0_17 = arith.constant 0 : index
    %27 = vector.load %arg5[%c0_16, %c0_17] : memref<1x32xf32, #tpu.memory_space<vmem>>, vector<1x32xf32>
    %28 = vector.broadcast %27 : vector<1x32xf32> to vector<128x32xf32>
    %29 = arith.addf %26, %28 : vector<128x32xf32>
    %30 = arith.mulf %12, %3 : vector<128x32xf32>
    %31 = arith.mulf %13, %1 : vector<128x32xf32>
    %32 = arith.subf %30, %31 : vector<128x32xf32>
    %33 = arith.subf %29, %32 : vector<128x32xf32>
    %cst_18 = arith.constant 5.000000e+00 : f32
    %34 = vector.broadcast %cst_18 : f32 to vector<128x32xf32>
    %35 = arith.minimumf %6, %34 : vector<128x32xf32>
    %36 = arith.mulf %35, %10 : vector<128x32xf32>
    %37 = arith.mulf %33, %33 : vector<128x32xf32>
    %38 = arith.mulf %37, %36 : vector<128x32xf32>
    %cst_19 = arith.constant dense<0.000000e+00> : vector<128xf32>
    %39 = vector.multi_reduction <add>, %38, %cst_19 [1] : vector<128x32xf32> to vector<128xf32>
    %40 = vector.shape_cast %39 : vector<128xf32> to vector<128x1xf32>
    %cst_20 = arith.constant dense<0.000000e+00> : vector<1xf32>
    %41 = vector.multi_reduction <add>, %40, %cst_20 [0] : vector<128x1xf32> to vector<1xf32>
    %42 = vector.shape_cast %41 : vector<1xf32> to vector<1x1xf32>
    %cst_21 = arith.constant 1.22070313E-4 : f32
    %43 = vector.broadcast %cst_21 : f32 to vector<1x1xf32>
    %44 = arith.mulf %42, %43 : vector<1x1xf32>
    %c0_22 = arith.constant 0 : index
    %c0_23 = arith.constant 0 : index
    %c0_24 = arith.constant 0 : index
    %45 = vector.load %arg6[%c0_22, %c0_23, %c0_24] : memref<1x1x1xf32, #tpu.memory_space<vmem>>, vector<1x1x1xf32>
    %46 = vector.shape_cast %45 : vector<1x1x1xf32> to vector<1x1xf32>
    %47 = vector.shape_cast %44 : vector<1x1xf32> to vector<1x1x1xf32>
    tpu.vector_store %arg6[%c0_22, %c0_23, %c0_24], %47 {strides = array<i32>} : memref<1x1x1xf32, #tpu.memory_space<vmem>>, vector<1x1x1xf32>,
    return
  }
  func.func @transform_0(%arg0: i32) -> (i32, i32, i32) {
    %c0_i32 = arith.constant 0 : i32
    %c0_i32_0 = arith.constant 0 : i32
    %c0_i32_1 = arith.constant 0 : i32
    return %arg0, %c0_i32, %c0_i32_0 : i32, i32, i32
  }
  func.func @transform_1(%arg0: i32) -> (i32, i32, i32) {
    %c0_i32 = arith.constant 0 : i32
    %c0_i32_0 = arith.constant 0 : i32
    %c0_i32_1 = arith.constant 0 : i32
    return %arg0, %c0_i32, %c0_i32_0 : i32, i32, i32
  }
  func.func @transform_2(%arg0: i32) -> (i32, i32) {
    %c0_i32 = arith.constant 0 : i32
    %c0_i32_0 = arith.constant 0 : i32
    %c0_i32_1 = arith.constant 0 : i32
    return %c0_i32, %c0_i32_0 : i32, i32
  }
  func.func @transform_3(%arg0: i32) -> (i32, i32) {
    %c0_i32 = arith.constant 0 : i32
    %c0_i32_0 = arith.constant 0 : i32
    %c0_i32_1 = arith.constant 0 : i32
    return %c0_i32, %c0_i32_0 : i32, i32
  }
  func.func @transform_4(%arg0: i32) -> (i32, i32) {
    %c0_i32 = arith.constant 0 : i32
    %c0_i32_0 = arith.constant 0 : i32
    %c0_i32_1 = arith.constant 0 : i32
    return %c0_i32, %c0_i32_0 : i32, i32
  }
  func.func @transform_5(%arg0: i32) -> (i32, i32, i32) {
    %c0_i32 = arith.constant 0 : i32
    %c0_i32_0 = arith.constant 0 : i32
    %c0_i32_1 = arith.constant 0 : i32
    return %arg0, %c0_i32, %c0_i32_0 : i32, i32, i32
  }
}

</mosaic_0001>

<llo_original>
// kernel: tpu_custom_call.1
$region0: #{tpu_custom_call.1}
  #allocation0 [shape = 'u32[]', space=smem, size = 0x4, offset = 0x4, fixed_abs, tag = 'smem constant byte address 0x4 - core index']
  #allocation1 [shape = 'u32[144,128]{1,0:T(1,128)}', space=vmem, size = 0x12000, scoped, tag = 'internal scratch']
  %s0 = inlined_call_operand.vmem [shape: f32[2,384,32], index: 0, kind: input, shape index: {}]
  %s1 = inlined_call_operand.vmem [shape: f32[2,128,128], index: 1, kind: input, shape index: {}]
  %s2 = inlined_call_operand.vmem [shape: bf16[32,128], index: 2, kind: input, shape index: {}]
  %s3 = inlined_call_operand.vmem [shape: bf16[128,32], index: 3, kind: input, shape index: {}]
  %s4 = inlined_call_operand.vmem [shape: f32[1,32], index: 4, kind: input, shape index: {}]
  %s5 = inlined_call_operand.vmem [shape: f32[2,1,1], index: 5, kind: output, shape index: {}]
  %s6 = sld [smem:[#allocation0]]
  $region53: #{tpu_custom_call.1} parent=0
    _
  %s8 = ssub.s32 1, %s6
  %s9 = scalar_select 0, %s8, %s6
  loop: start=0, step=1, limit=4
  $region2: #{tpu_custom_call.1} parent=0 // loop_pre_header
    _
  $region3: #{tpu_custom_call.1} parent=0 // loop_header
    %s11 = sphi 0, %s15
    %p12 = scmp.ge.s32.totalorder %s11, 4
    %s21 = sphi 0, %s23
    %s24 = sphi 0, %s21
    %s25 = sphi 0, %s24
    %s41 = sphi 0, %s25
    %s47 = sphi 0, %s49
    %s50 = sphi 0, %s47
    %s51 = sphi 0, %s50
    %s67 = sphi 0, %s51
    %s71 = sphi 0, %s71
    %s73 = sphi 0, %s71
    %s74 = sphi 0, %s73
    %s88 = sphi 0, %s74
    %s92 = sphi 0, %s92
    %s94 = sphi 0, %s92
    %s95 = sphi 0, %s94
    %s109 = sphi 0, %s95
    %s113 = sphi 0, %s113
    %s115 = sphi 0, %s113
    %s116 = sphi 0, %s115
    %s130 = sphi 0, %s116
    %s136 = sphi 0, %s138
    %s139 = sphi 0, %s136
    %s140 = sphi 0, %s139
    %s156 = sphi 0, %s140
  $region4: #{tpu_custom_call.1} parent=0 // loop_header_branch
    %14 = sbr.rel (%p12) target = $region8
  $region5: #{tpu_custom_call.1} parent=0 // loop_body
    %s16 = ssub.s32 %s11, 1
    %s17 = ssub.s32 %s11, 2
    %s18 = sadd.s32 %s11, 1
    %s19 = ssub.s32 %s11, %s18
    %p20 = scmp.eq.s32.totalorder %s19, 0
    %s22 = sadd.s32 %s21, 1
    %s23 = scalar_select %p20, %s21, %s22
    %p26 = pneg %p20
    %p27 = scmp.eq.s32.totalorder %s11, 1
    %p28 = por %p26, %p27
    %p29 = scmp.ne.s32.totalorder %s21, %s24
    %p30 = scmp.eq.s32.totalorder %s11, 0
    %p31 = por %p29, %p30
    %p32 = scmp.ne.s32.totalorder %s21, %s24
    %p33 = scmp.eq.s32.totalorder %s16, 1
    %p34 = por %p32, %p33
    %p35 = scmp.ne.s32.totalorder %s24, %s25
    %p36 = scmp.eq.s32.totalorder %s16, 0
    %p37 = por %p35, %p36
    %p38 = scmp.ne.s32.totalorder %s24, %s25
    %p39 = scmp.eq.s32.totalorder %s17, 1
    %p40 = por %p38, %p39
    %p42 = scmp.ne.s32.totalorder %s25, %s41
    %p43 = scmp.eq.s32.totalorder %s17, 0
    %p44 = por %p42, %p43
    %s45 = ssub.s32 %s11, %s18
    %p46 = scmp.eq.s32.totalorder %s45, 0
    %s48 = sadd.s32 %s47, 1
    %s49 = scalar_select %p46, %s47, %s48
    %p52 = pneg %p46
    %p53 = scmp.eq.s32.totalorder %s11, 1
    %p54 = por %p52, %p53
    %p55 = scmp.ne.s32.totalorder %s47, %s50
    %p56 = scmp.eq.s32.totalorder %s11, 0
    %p57 = por %p55, %p56
    %p58 = scmp.ne.s32.totalorder %s47, %s50
    %p59 = scmp.eq.s32.totalorder %s16, 1
    %p60 = por %p58, %p59
    %p61 = scmp.ne.s32.totalorder %s50, %s51
    %p62 = scmp.eq.s32.totalorder %s16, 0
    %p63 = por %p61, %p62
    %p64 = scmp.ne.s32.totalorder %s50, %s51
    %p65 = scmp.eq.s32.totalorder %s17, 1
    %p66 = por %p64, %p65
    %p68 = scmp.ne.s32.totalorder %s51, %s67
    %p69 = scmp.eq.s32.totalorder %s17, 0
    %p70 = por %p68, %p69
    %s72 = sadd.s32 %s71, 1
    %p75 = scmp.eq.s32.totalorder %s11, 1
    %p76 = scmp.ne.s32.totalorder %s71, %s73
    %p77 = scmp.eq.s32.totalorder %s11, 0
    %p78 = por %p76, %p77
    %p79 = scmp.ne.s32.totalorder %s71, %s73
    %p80 = scmp.eq.s32.totalorder %s16, 1
    %p81 = por %p79, %p80
    %p82 = scmp.ne.s32.totalorder %s73, %s74
    %p83 = scmp.eq.s32.totalorder %s16, 0
    %p84 = por %p82, %p83
    %p85 = scmp.ne.s32.totalorder %s73, %s74
    %p86 = scmp.eq.s32.totalorder %s17, 1
    %p87 = por %p85, %p86
    %p89 = scmp.ne.s32.totalorder %s74, %s88
    %p90 = scmp.eq.s32.totalorder %s17, 0
    %p91 = por %p89, %p90
    %s93 = sadd.s32 %s92, 1
    %p96 = scmp.eq.s32.totalorder %s11, 1
    %p97 = scmp.ne.s32.totalorder %s92, %s94
    %p98 = scmp.eq.s32.totalorder %s11, 0
    %p99 = por %p97, %p98
    %p100 = scmp.ne.s32.totalorder %s92, %s94
    %p101 = scmp.eq.s32.totalorder %s16, 1
    %p102 = por %p100, %p101
    %p103 = scmp.ne.s32.totalorder %s94, %s95
    %p104 = scmp.eq.s32.totalorder %s16, 0
    %p105 = por %p103, %p104
    %p106 = scmp.ne.s32.totalorder %s94, %s95
    %p107 = scmp.eq.s32.totalorder %s17, 1
    %p108 = por %p106, %p107
    %p110 = scmp.ne.s32.totalorder %s95, %s109
    %p111 = scmp.eq.s32.totalorder %s17, 0
    %p112 = por %p110, %p111
    %s114 = sadd.s32 %s113, 1
    %p117 = scmp.eq.s32.totalorder %s11, 1
    %p118 = scmp.ne.s32.totalorder %s113, %s115
    %p119 = scmp.eq.s32.totalorder %s11, 0
    %p120 = por %p118, %p119
    %p121 = scmp.ne.s32.totalorder %s113, %s115
    %p122 = scmp.eq.s32.totalorder %s16, 1
    %p123 = por %p121, %p122
    %p124 = scmp.ne.s32.totalorder %s115, %s116
    %p125 = scmp.eq.s32.totalorder %s16, 0
    %p126 = por %p124, %p125
    %p127 = scmp.ne.s32.totalorder %s115, %s116
    %p128 = scmp.eq.s32.totalorder %s17, 1
    %p129 = por %p127, %p128
    %p131 = scmp.ne.s32.totalorder %s116, %s130
    %p132 = scmp.eq.s32.totalorder %s17, 0
    %p133 = por %p131, %p132
    %s134 = ssub.s32 %s11, %s18
    %p135 = scmp.eq.s32.totalorder %s134, 0
    %s137 = sadd.s32 %s136, 1
    %s138 = scalar_select %p135, %s136, %s137
    %p141 = pneg %p135
    %p142 = scmp.eq.s32.totalorder %s11, 1
    %p143 = por %p141, %p142
    %p144 = scmp.ne.s32.totalorder %s136, %s139
    %p145 = scmp.eq.s32.totalorder %s11, 0
    %p146 = por %p144, %p145
    %p147 = scmp.ne.s32.totalorder %s136, %s139
    %p148 = scmp.eq.s32.totalorder %s16, 1
    %p149 = por %p147, %p148
    %p150 = scmp.ne.s32.totalorder %s139, %s140
    %p151 = scmp.eq.s32.totalorder %s16, 0
    %p152 = por %p150, %p151
    %p153 = scmp.ne.s32.totalorder %s139, %s140
    %p154 = scmp.eq.s32.totalorder %s17, 1
    %p155 = por %p153, %p154
    %p157 = scmp.ne.s32.totalorder %s140, %s156
    %p158 = scmp.eq.s32.totalorder %s17, 0
    %p159 = por %p157, %p158
    %p160 = scmp.le.s32.totalorder 1, %s11
    %p161 = scmp.lt.s32.totalorder %s11, 3
    %p162 = pnand %p160, %p161
    %p163 = pneg %p162
    // Predicated region
    $region9: #{tpu_custom_call.1} parent=5 // pred_check
      _
    $region10: #{tpu_custom_call.1} parent=5 // pred_check_branch
      %165 = sbr.rel (%p162) target = $region12
    $region11: #{tpu_custom_call.1} parent=5 // pred_region
      %s166 = ssub.s32 %s11, 1
      // Predicated region
      $region13: #{tpu_custom_call.1} parent=11 // pred_check
        %p167 = pneg %p84
      $region14: #{tpu_custom_call.1} parent=11 // pred_check_branch
        %169 = sbr.rel (%p167) target = $region16
      $region15: #{tpu_custom_call.1} parent=11 // pred_region
        _
      $region16: #{tpu_custom_call.1} parent=11 // pred_fallthru
        _
      // Predicated region
      $region17: #{tpu_custom_call.1} parent=11 // pred_check
        %p170 = pneg %p105
      $region18: #{tpu_custom_call.1} parent=11 // pred_check_branch
        %172 = sbr.rel (%p170) target = $region20
      $region19: #{tpu_custom_call.1} parent=11 // pred_region
        _
      $region20: #{tpu_custom_call.1} parent=11 // pred_fallthru
        _
      // Predicated region
      $region21: #{tpu_custom_call.1} parent=11 // pred_check
        %p173 = pneg %p126
      $region22: #{tpu_custom_call.1} parent=11 // pred_check_branch
        %175 = sbr.rel (%p173) target = $region24
      $region23: #{tpu_custom_call.1} parent=11 // pred_region
        _
      $region24: #{tpu_custom_call.1} parent=11 // pred_fallthru
        _
    $region12: #{tpu_custom_call.1} parent=5 // pred_fallthru
      _
    %p176 = scmp.lt.s32.totalorder %s11, 2
    // Predicated region
    $region25: #{tpu_custom_call.1} parent=5 // pred_check
      %p177 = pneg %p176
    $region26: #{tpu_custom_call.1} parent=5 // pred_check_branch
      %179 = sbr.rel (%p177) target = $region28
    $region27: #{tpu_custom_call.1} parent=5 // pred_region
      // Predicated region
      $region29: #{tpu_custom_call.1} parent=27 // pred_check
        %p180 = pneg %p31
      $region30: #{tpu_custom_call.1} parent=27 // pred_check_branch
        %182 = sbr.rel (%p180) target = $region32
      $region31: #{tpu_custom_call.1} parent=27 // pred_region
        %p183 = scmp.lt.s32.totalorder %s11, 1
        %s184 = scalar_select %p183, %s11, 1
        %s185 = smul.addr %s184, 48
        %s186 = smul.addr %s185, 8
        %s187 = scalar_lea.vmem %s0, %s186
      $region32: #{tpu_custom_call.1} parent=27 // pred_fallthru
        _
      // Predicated region
      $region33: #{tpu_custom_call.1} parent=27 // pred_check
        %p188 = pneg %p57
      $region34: #{tpu_custom_call.1} parent=27 // pred_check_branch
        %190 = sbr.rel (%p188) target = $region36
      $region35: #{tpu_custom_call.1} parent=27 // pred_region
        %p191 = scmp.lt.s32.totalorder %s11, 1
        %s192 = scalar_select %p191, %s11, 1
        %s193 = smul.addr %s192, 16
        %s194 = smul.addr %s193, 8
        %s195 = scalar_lea.vmem %s1, %s194
      $region36: #{tpu_custom_call.1} parent=27 // pred_fallthru
        _
    $region28: #{tpu_custom_call.1} parent=5 // pred_fallthru
      _
    %p196 = scmp.le.s32.totalorder 1, %s11
    %p197 = scmp.lt.s32.totalorder %s11, 3
    %p198 = pnand %p196, %p197
    %p199 = pneg %p198
    // Predicated region
    $region37: #{tpu_custom_call.1} parent=5 // pred_check
      _
    $region38: #{tpu_custom_call.1} parent=5 // pred_check_branch
      %201 = sbr.rel (%p198) target = $region40
    $region39: #{tpu_custom_call.1} parent=5 // pred_region
      %s202 = ssub.s32 %s11, 1
      %p203 = scmp.lt.s32.totalorder %s16, 1
      %s204 = scalar_select %p203, %s16, 1
      %s205 = smul.addr %s204, 48
      %s206 = smul.addr %s205, 8
      %s207 = scalar_lea.vmem %s0, %s206
      %p208 = pneg %p37
      %p209 = pneg %p34
      %p210 = scmp.lt.s32.totalorder %s16, 1
      %s211 = scalar_select %p210, %s16, 1
      %s212 = smul.addr %s211, 16
      %s213 = smul.addr %s212, 8
      %s214 = scalar_lea.vmem %s1, %s213
      %p215 = pneg %p63
      %p216 = pneg %p60
      %p217 = pneg %p84
      %p218 = pneg %p81
      %p219 = pneg %p105
      %p220 = pneg %p102
      %p221 = pneg %p126
      %p222 = pneg %p123
      %p223 = pneg %p152
      %p224 = pneg %p149
      %p225 = scmp.lt.s32.totalorder %s16, 1
      %s226 = scalar_select %p225, %s16, 1
      %s227 = scalar_lea.vmem %s5, %s226
      %p228 = scmp.lt.s32.totalorder %s16, 1
      %s229 = scalar_select %p228, %s16, 1
      %s230 = smul.addr %s229, 48
      %s231 = smul.addr %s230, 8
      %s232 = scalar_lea.vmem %s0, %s231
      %p233 = scmp.lt.s32.totalorder %s16, 1
      %s234 = scalar_select %p233, %s16, 1
      %s235 = smul.addr %s234, 16
      %s236 = smul.addr %s235, 8
      %s237 = scalar_lea.vmem %s1, %s236
      %p238 = scmp.lt.s32.totalorder %s16, 1
      %s239 = scalar_select %p238, %s16, 1
      %s240 = scalar_lea.vmem %s5, %s239
      %v242 = vld [vmem:[%s232] sm:$0xff]
      %v243 = vld [vmem:[%s232 + $0x8] sm:$0xff]
      %v244 = vld [vmem:[%s232 + $0x10] sm:$0xff]
      %v245 = vld [vmem:[%s232 + $0x18] sm:$0xff]
      %v246 = vld [vmem:[%s232 + $0x20] sm:$0xff]
      %v247 = vld [vmem:[%s232 + $0x28] sm:$0xff]
      %v248 = vld [vmem:[%s232 + $0x30] sm:$0xff]
      %v249 = vld [vmem:[%s232 + $0x38] sm:$0xff]
      %v250 = vld [vmem:[%s232 + $0x40] sm:$0xff]
      %v251 = vld [vmem:[%s232 + $0x48] sm:$0xff]
      %v252 = vld [vmem:[%s232 + $0x50] sm:$0xff]
      %v253 = vld [vmem:[%s232 + $0x58] sm:$0xff]
      %v254 = vld [vmem:[%s232 + $0x60] sm:$0xff]
      %v255 = vld [vmem:[%s232 + $0x68] sm:$0xff]
      %v256 = vld [vmem:[%s232 + $0x70] sm:$0xff]
      %v257 = vld [vmem:[%s232 + $0x78] sm:$0xff]
      %v258 = vld [vmem:[%s232 + $0x80] sm:$0xff]
      %v259 = vld [vmem:[%s232 + $0x88] sm:$0xff]
      %v260 = vld [vmem:[%s232 + $0x90] sm:$0xff]
      %v261 = vld [vmem:[%s232 + $0x98] sm:$0xff]
      %v262 = vld [vmem:[%s232 + $0xa0] sm:$0xff]
      %v263 = vld [vmem:[%s232 + $0xa8] sm:$0xff]
      %v264 = vld [vmem:[%s232 + $0xb0] sm:$0xff]
      %v265 = vld [vmem:[%s232 + $0xb8] sm:$0xff]
      %v266 = vld [vmem:[%s232 + $0xc0] sm:$0xff]
      %v267 = vld [vmem:[%s232 + $0xc8] sm:$0xff]
      %v268 = vld [vmem:[%s232 + $0xd0] sm:$0xff]
      %v269 = vld [vmem:[%s232 + $0xd8] sm:$0xff]
      %v270 = vld [vmem:[%s232 + $0xe0] sm:$0xff]
      %v271 = vld [vmem:[%s232 + $0xe8] sm:$0xff]
      %v272 = vld [vmem:[%s232 + $0xf0] sm:$0xff]
      %v273 = vld [vmem:[%s232 + $0xf8] sm:$0xff]
      %v274 = vld [vmem:[%s232 + $0x100] sm:$0xff]
      %v275 = vld [vmem:[%s232 + $0x108] sm:$0xff]
      %v276 = vld [vmem:[%s232 + $0x110] sm:$0xff]
      %v277 = vld [vmem:[%s232 + $0x118] sm:$0xff]
      %v278 = vld [vmem:[%s232 + $0x120] sm:$0xff]
      %v279 = vld [vmem:[%s232 + $0x128] sm:$0xff]
      %v280 = vld [vmem:[%s232 + $0x130] sm:$0xff]
      %v281 = vld [vmem:[%s232 + $0x138] sm:$0xff]
      %v282 = vld [vmem:[%s232 + $0x140] sm:$0xff]
      %v283 = vld [vmem:[%s232 + $0x148] sm:$0xff]
      %v284 = vld [vmem:[%s232 + $0x150] sm:$0xff]
      %v285 = vld [vmem:[%s232 + $0x158] sm:$0xff]
      %v286 = vld [vmem:[%s232 + $0x160] sm:$0xff]
      %v287 = vld [vmem:[%s232 + $0x168] sm:$0xff]
      %v288 = vld [vmem:[%s232 + $0x170] sm:$0xff]
      %v289 = vld [vmem:[%s232 + $0x178] sm:$0xff]
      %v290 = vmul.f32 %v274, 1.442695
      %v291 = vpow.pop %v290
      %v292 = vmul.f32 %v275, 1.442695
      %v293 = vpow.pop %v292
      %v294 = vmul.f32 %v276, 1.442695
      %v295 = vpow.pop %v294
      %v296 = vmul.f32 %v277, 1.442695
      %v297 = vpow.pop %v296
      %v298 = vmul.f32 %v278, 1.442695
      %v299 = vpow.pop %v298
      %v300 = vmul.f32 %v279, 1.442695
      %v301 = vpow.pop %v300
      %v302 = vmul.f32 %v280, 1.442695
      %v303 = vpow.pop %v302
      %v304 = vmul.f32 %v281, 1.442695
      %v305 = vpow.pop %v304
      %v306 = vmul.f32 %v282, 1.442695
      %v307 = vpow.pop %v306
      %v308 = vmul.f32 %v283, 1.442695
      %v309 = vpow.pop %v308
      %v310 = vmul.f32 %v284, 1.442695
      %v311 = vpow.pop %v310
      %v312 = vmul.f32 %v285, 1.442695
      %v313 = vpow.pop %v312
      %v314 = vmul.f32 %v286, 1.442695
      %v315 = vpow.pop %v314
      %v316 = vmul.f32 %v287, 1.442695
      %v317 = vpow.pop %v316
      %v318 = vmul.f32 %v288, 1.442695
      %v319 = vpow.pop %v318
      %v320 = vmul.f32 %v289, 1.442695
      %v321 = vpow.pop %v320
      %v322 = vadd.f32 %v291, 1.0
      %v323 = vadd.f32 %v293, 1.0
      %v324 = vadd.f32 %v295, 1.0
      %v325 = vadd.f32 %v297, 1.0
      %v326 = vadd.f32 %v299, 1.0
      %v327 = vadd.f32 %v301, 1.0
      %v328 = vadd.f32 %v303, 1.0
      %v329 = vadd.f32 %v305, 1.0
      %v330 = vadd.f32 %v307, 1.0
      %v331 = vadd.f32 %v309, 1.0
      %v332 = vadd.f32 %v311, 1.0
      %v333 = vadd.f32 %v313, 1.0
      %v334 = vadd.f32 %v315, 1.0
      %v335 = vadd.f32 %v317, 1.0
      %v336 = vadd.f32 %v319, 1.0
      %v337 = vadd.f32 %v321, 1.0
      %v338 = vrcp.pop %v322
      %v339 = vmul.f32 1.0, %v338
      %v340 = vrcp.pop %v323
      %v341 = vmul.f32 1.0, %v340
      %v342 = vrcp.pop %v324
      %v343 = vmul.f32 1.0, %v342
      %v344 = vrcp.pop %v325
      %v345 = vmul.f32 1.0, %v344
      %v346 = vrcp.pop %v326
      %v347 = vmul.f32 1.0, %v346
      %v348 = vrcp.pop %v327
      %v349 = vmul.f32 1.0, %v348
      %v350 = vrcp.pop %v328
      %v351 = vmul.f32 1.0, %v350
      %v352 = vrcp.pop %v329
      %v353 = vmul.f32 1.0, %v352
      %v354 = vrcp.pop %v330
      %v355 = vmul.f32 1.0, %v354
      %v356 = vrcp.pop %v331
      %v357 = vmul.f32 1.0, %v356
      %v358 = vrcp.pop %v332
      %v359 = vmul.f32 1.0, %v358
      %v360 = vrcp.pop %v333
      %v361 = vmul.f32 1.0, %v360
      %v362 = vrcp.pop %v334
      %v363 = vmul.f32 1.0, %v362
      %v364 = vrcp.pop %v335
      %v365 = vmul.f32 1.0, %v364
      %v366 = vrcp.pop %v336
      %v367 = vmul.f32 1.0, %v366
      %v368 = vrcp.pop %v337
      %v369 = vmul.f32 1.0, %v368
      %v370 = vmul.f32 %v291, %v339
      %v371 = vmul.f32 %v293, %v341
      %v372 = vmul.f32 %v295, %v343
      %v373 = vmul.f32 %v297, %v345
      %v374 = vmul.f32 %v299, %v347
      %v375 = vmul.f32 %v301, %v349
      %v376 = vmul.f32 %v303, %v351
      %v377 = vmul.f32 %v305, %v353
      %v378 = vmul.f32 %v307, %v355
      %v379 = vmul.f32 %v309, %v357
      %v380 = vmul.f32 %v311, %v359
      %v381 = vmul.f32 %v313, %v361
      %v382 = vmul.f32 %v315, %v363
      %v383 = vmul.f32 %v317, %v365
      %v384 = vmul.f32 %v319, %v367
      %v385 = vmul.f32 %v321, %v369
      %v386 = vrsqrt.pop %v370
      %v387 = vmul.f32 %v370, %v386
      %vm388 = vcmp.eq.f32.partialorder %v370, inf
      %v389 = vsel %vm388, %v370, %v387
      %vm390 = vcmp.eq.f32.partialorder %v370, 0.0
      %v391 = vand.u32 %v370, 2147483648
      %v392 = vsel %vm390, %v391, %v389
      %v393 = vrsqrt.pop %v371
      %v394 = vmul.f32 %v371, %v393
      %vm395 = vcmp.eq.f32.partialorder %v371, inf
      %v396 = vsel %vm395, %v371, %v394
      %vm397 = vcmp.eq.f32.partialorder %v371, 0.0
      %v398 = vand.u32 %v371, 2147483648
      %v399 = vsel %vm397, %v398, %v396
      %v400 = vrsqrt.pop %v372
      %v401 = vmul.f32 %v372, %v400
      %vm402 = vcmp.eq.f32.partialorder %v372, inf
      %v403 = vsel %vm402, %v372, %v401
      %vm404 = vcmp.eq.f32.partialorder %v372, 0.0
      %v405 = vand.u32 %v372, 2147483648
      %v406 = vsel %vm404, %v405, %v403
      %v407 = vrsqrt.pop %v373
      %v408 = vmul.f32 %v373, %v407
      %vm409 = vcmp.eq.f32.partialorder %v373, inf
      %v410 = vsel %vm409, %v373, %v408
      %vm411 = vcmp.eq.f32.partialorder %v373, 0.0
      %v412 = vand.u32 %v373, 2147483648
      %v413 = vsel %vm411, %v412, %v410
      %v414 = vrsqrt.pop %v374
      %v415 = vmul.f32 %v374, %v414
      %vm416 = vcmp.eq.f32.partialorder %v374, inf
      %v417 = vsel %vm416, %v374, %v415
      %vm418 = vcmp.eq.f32.partialorder %v374, 0.0
      %v419 = vand.u32 %v374, 2147483648
      %v420 = vsel %vm418, %v419, %v417
      %v421 = vrsqrt.pop %v375
      %v422 = vmul.f32 %v375, %v421
      %vm423 = vcmp.eq.f32.partialorder %v375, inf
      %v424 = vsel %vm423, %v375, %v422
      %vm425 = vcmp.eq.f32.partialorder %v375, 0.0
      %v426 = vand.u32 %v375, 2147483648
      %v427 = vsel %vm425, %v426, %v424
      %v428 = vrsqrt.pop %v376
      %v429 = vmul.f32 %v376, %v428
      %vm430 = vcmp.eq.f32.partialorder %v376, inf
      %v431 = vsel %vm430, %v376, %v429
      %vm432 = vcmp.eq.f32.partialorder %v376, 0.0
      %v433 = vand.u32 %v376, 2147483648
      %v434 = vsel %vm432, %v433, %v431
      %v435 = vrsqrt.pop %v377
      %v436 = vmul.f32 %v377, %v435
      %vm437 = vcmp.eq.f32.partialorder %v377, inf
      %v438 = vsel %vm437, %v377, %v436
      %vm439 = vcmp.eq.f32.partialorder %v377, 0.0
      %v440 = vand.u32 %v377, 2147483648
      %v441 = vsel %vm439, %v440, %v438
      %v442 = vrsqrt.pop %v378
      %v443 = vmul.f32 %v378, %v442
      %vm444 = vcmp.eq.f32.partialorder %v378, inf
      %v445 = vsel %vm444, %v378, %v443
      %vm446 = vcmp.eq.f32.partialorder %v378, 0.0
      %v447 = vand.u32 %v378, 2147483648
      %v448 = vsel %vm446, %v447, %v445
      %v449 = vrsqrt.pop %v379
      %v450 = vmul.f32 %v379, %v449
      %vm451 = vcmp.eq.f32.partialorder %v379, inf
      %v452 = vsel %vm451, %v379, %v450
      %vm453 = vcmp.eq.f32.partialorder %v379, 0.0
      %v454 = vand.u32 %v379, 2147483648
      %v455 = vsel %vm453, %v454, %v452
      %v456 = vrsqrt.pop %v380
      %v457 = vmul.f32 %v380, %v456
      %vm458 = vcmp.eq.f32.partialorder %v380, inf
      %v459 = vsel %vm458, %v380, %v457
      %vm460 = vcmp.eq.f32.partialorder %v380, 0.0
      %v461 = vand.u32 %v380, 2147483648
      %v462 = vsel %vm460, %v461, %v459
      %v463 = vrsqrt.pop %v381
      %v464 = vmul.f32 %v381, %v463
      %vm465 = vcmp.eq.f32.partialorder %v381, inf
      %v466 = vsel %vm465, %v381, %v464
      %vm467 = vcmp.eq.f32.partialorder %v381, 0.0
      %v468 = vand.u32 %v381, 2147483648
      %v469 = vsel %vm467, %v468, %v466
      %v470 = vrsqrt.pop %v382
      %v471 = vmul.f32 %v382, %v470
      %vm472 = vcmp.eq.f32.partialorder %v382, inf
      %v473 = vsel %vm472, %v382, %v471
      %vm474 = vcmp.eq.f32.partialorder %v382, 0.0
      %v475 = vand.u32 %v382, 2147483648
      %v476 = vsel %vm474, %v475, %v473
      %v477 = vrsqrt.pop %v383
      %v478 = vmul.f32 %v383, %v477
      %vm479 = vcmp.eq.f32.partialorder %v383, inf
      %v480 = vsel %vm479, %v383, %v478
      %vm481 = vcmp.eq.f32.partialorder %v383, 0.0
      %v482 = vand.u32 %v383, 2147483648
      %v483 = vsel %vm481, %v482, %v480
      %v484 = vrsqrt.pop %v384
      %v485 = vmul.f32 %v384, %v484
      %vm486 = vcmp.eq.f32.partialorder %v384, inf
      %v487 = vsel %vm486, %v384, %v485
      %vm488 = vcmp.eq.f32.partialorder %v384, 0.0
      %v489 = vand.u32 %v384, 2147483648
      %v490 = vsel %vm488, %v489, %v487
      %v491 = vrsqrt.pop %v385
      %v492 = vmul.f32 %v385, %v491
      %vm493 = vcmp.eq.f32.partialorder %v385, inf
      %v494 = vsel %vm493, %v385, %v492
      %vm495 = vcmp.eq.f32.partialorder %v385, 0.0
      %v496 = vand.u32 %v385, 2147483648
      %v497 = vsel %vm495, %v496, %v494
      %v498 = vrsqrt.pop %v339
      %v499 = vmul.f32 %v339, %v498
      %vm500 = vcmp.eq.f32.partialorder %v339, inf
      %v501 = vsel %vm500, %v339, %v499
      %vm502 = vcmp.eq.f32.partialorder %v339, 0.0
      %v503 = vand.u32 %v339, 2147483648
      %v504 = vsel %vm502, %v503, %v501
      %v505 = vrsqrt.pop %v341
      %v506 = vmul.f32 %v341, %v505
      %vm507 = vcmp.eq.f32.partialorder %v341, inf
      %v508 = vsel %vm507, %v341, %v506
      %vm509 = vcmp.eq.f32.partialorder %v341, 0.0
      %v510 = vand.u32 %v341, 2147483648
      %v511 = vsel %vm509, %v510, %v508
      %v512 = vrsqrt.pop %v343
      %v513 = vmul.f32 %v343, %v512
      %vm514 = vcmp.eq.f32.partialorder %v343, inf
      %v515 = vsel %vm514, %v343, %v513
      %vm516 = vcmp.eq.f32.partialorder %v343, 0.0
      %v517 = vand.u32 %v343, 2147483648
      %v518 = vsel %vm516, %v517, %v515
      %v519 = vrsqrt.pop %v345
      %v520 = vmul.f32 %v345, %v519
      %vm521 = vcmp.eq.f32.partialorder %v345, inf
      %v522 = vsel %vm521, %v345, %v520
      %vm523 = vcmp.eq.f32.partialorder %v345, 0.0
      %v524 = vand.u32 %v345, 2147483648
      %v525 = vsel %vm523, %v524, %v522
      %v526 = vrsqrt.pop %v347
      %v527 = vmul.f32 %v347, %v526
      %vm528 = vcmp.eq.f32.partialorder %v347, inf
      %v529 = vsel %vm528, %v347, %v527
      %vm530 = vcmp.eq.f32.partialorder %v347, 0.0
      %v531 = vand.u32 %v347, 2147483648
      %v532 = vsel %vm530, %v531, %v529
      %v533 = vrsqrt.pop %v349
      %v534 = vmul.f32 %v349, %v533
      %vm535 = vcmp.eq.f32.partialorder %v349, inf
      %v536 = vsel %vm535, %v349, %v534
      %vm537 = vcmp.eq.f32.partialorder %v349, 0.0
      %v538 = vand.u32 %v349, 2147483648
      %v539 = vsel %vm537, %v538, %v536
      %v540 = vrsqrt.pop %v351
      %v541 = vmul.f32 %v351, %v540
      %vm542 = vcmp.eq.f32.partialorder %v351, inf
      %v543 = vsel %vm542, %v351, %v541
      %vm544 = vcmp.eq.f32.partialorder %v351, 0.0
      %v545 = vand.u32 %v351, 2147483648
      %v546 = vsel %vm544, %v545, %v543
      %v547 = vrsqrt.pop %v353
      %v548 = vmul.f32 %v353, %v547
      %vm549 = vcmp.eq.f32.partialorder %v353, inf
      %v550 = vsel %vm549, %v353, %v548
      %vm551 = vcmp.eq.f32.partialorder %v353, 0.0
      %v552 = vand.u32 %v353, 2147483648
      %v553 = vsel %vm551, %v552, %v550
      %v554 = vrsqrt.pop %v355
      %v555 = vmul.f32 %v355, %v554
      %vm556 = vcmp.eq.f32.partialorder %v355, inf
      %v557 = vsel %vm556, %v355, %v555
      %vm558 = vcmp.eq.f32.partialorder %v355, 0.0
      %v559 = vand.u32 %v355, 2147483648
      %v560 = vsel %vm558, %v559, %v557
      %v561 = vrsqrt.pop %v357
      %v562 = vmul.f32 %v357, %v561
      %vm563 = vcmp.eq.f32.partialorder %v357, inf
      %v564 = vsel %vm563, %v357, %v562
      %vm565 = vcmp.eq.f32.partialorder %v357, 0.0
      %v566 = vand.u32 %v357, 2147483648
      %v567 = vsel %vm565, %v566, %v564
      %v568 = vrsqrt.pop %v359
      %v569 = vmul.f32 %v359, %v568
      %vm570 = vcmp.eq.f32.partialorder %v359, inf
      %v571 = vsel %vm570, %v359, %v569
      %vm572 = vcmp.eq.f32.partialorder %v359, 0.0
      %v573 = vand.u32 %v359, 2147483648
      %v574 = vsel %vm572, %v573, %v571
      %v575 = vrsqrt.pop %v361
      %v576 = vmul.f32 %v361, %v575
      %vm577 = vcmp.eq.f32.partialorder %v361, inf
      %v578 = vsel %vm577, %v361, %v576
      %vm579 = vcmp.eq.f32.partialorder %v361, 0.0
      %v580 = vand.u32 %v361, 2147483648
      %v581 = vsel %vm579, %v580, %v578
      %v582 = vrsqrt.pop %v363
      %v583 = vmul.f32 %v363, %v582
      %vm584 = vcmp.eq.f32.partialorder %v363, inf
      %v585 = vsel %vm584, %v363, %v583
      %vm586 = vcmp.eq.f32.partialorder %v363, 0.0
      %v587 = vand.u32 %v363, 2147483648
      %v588 = vsel %vm586, %v587, %v585
      %v589 = vrsqrt.pop %v365
      %v590 = vmul.f32 %v365, %v589
      %vm591 = vcmp.eq.f32.partialorder %v365, inf
      %v592 = vsel %vm591, %v365, %v590
      %vm593 = vcmp.eq.f32.partialorder %v365, 0.0
      %v594 = vand.u32 %v365, 2147483648
      %v595 = vsel %vm593, %v594, %v592
      %v596 = vrsqrt.pop %v367
      %v597 = vmul.f32 %v367, %v596
      %vm598 = vcmp.eq.f32.partialorder %v367, inf
      %v599 = vsel %vm598, %v367, %v597
      %vm600 = vcmp.eq.f32.partialorder %v367, 0.0
      %v601 = vand.u32 %v367, 2147483648
      %v602 = vsel %vm600, %v601, %v599
      %v603 = vrsqrt.pop %v369
      %v604 = vmul.f32 %v369, %v603
      %vm605 = vcmp.eq.f32.partialorder %v369, inf
      %v606 = vsel %vm605, %v369, %v604
      %vm607 = vcmp.eq.f32.partialorder %v369, 0.0
      %v608 = vand.u32 %v369, 2147483648
      %v609 = vsel %vm607, %v608, %v606
      %v610 = vmul.f32 %v242, %v392
      %v611 = vmul.f32 %v243, %v399
      %v612 = vmul.f32 %v244, %v406
      %v613 = vmul.f32 %v245, %v413
      %v614 = vmul.f32 %v246, %v420
      %v615 = vmul.f32 %v247, %v427
      %v616 = vmul.f32 %v248, %v434
      %v617 = vmul.f32 %v249, %v441
      %v618 = vmul.f32 %v250, %v448
      %v619 = vmul.f32 %v251, %v455
      %v620 = vmul.f32 %v252, %v462
      %v621 = vmul.f32 %v253, %v469
      %v622 = vmul.f32 %v254, %v476
      %v623 = vmul.f32 %v255, %v483
      %v624 = vmul.f32 %v256, %v490
      %v625 = vmul.f32 %v257, %v497
      %v626 = vmul.f32 %v258, %v504
      %v627 = vmul.f32 %v259, %v511
      %v628 = vmul.f32 %v260, %v518
      %v629 = vmul.f32 %v261, %v525
      %v630 = vmul.f32 %v262, %v532
      %v631 = vmul.f32 %v263, %v539
      %v632 = vmul.f32 %v264, %v546
      %v633 = vmul.f32 %v265, %v553
      %v634 = vmul.f32 %v266, %v560
      %v635 = vmul.f32 %v267, %v567
      %v636 = vmul.f32 %v268, %v574
      %v637 = vmul.f32 %v269, %v581
      %v638 = vmul.f32 %v270, %v588
      %v639 = vmul.f32 %v271, %v595
      %v640 = vmul.f32 %v272, %v602
      %v641 = vmul.f32 %v273, %v609
      %v642 = vadd.f32 %v610, %v626
      %v643 = vadd.f32 %v611, %v627
      %v644 = vadd.f32 %v612, %v628
      %v645 = vadd.f32 %v613, %v629
      %v646 = vadd.f32 %v614, %v630
      %v647 = vadd.f32 %v615, %v631
      %v648 = vadd.f32 %v616, %v632
      %v649 = vadd.f32 %v617, %v633
      %v650 = vadd.f32 %v618, %v634
      %v651 = vadd.f32 %v619, %v635
      %v652 = vadd.f32 %v620, %v636
      %v653 = vadd.f32 %v621, %v637
      %v654 = vadd.f32 %v622, %v638
      %v655 = vadd.f32 %v623, %v639
      %v656 = vadd.f32 %v624, %v640
      %v657 = vadd.f32 %v625, %v641
      %v658 = vpack.c.bf16 %v643, %v642
      %v659 = vpack.c.bf16 %v645, %v644
      %v660 = vpack.c.bf16 %v647, %v646
      %v661 = vpack.c.bf16 %v649, %v648
      %v662 = vpack.c.bf16 %v651, %v650
      %v663 = vpack.c.bf16 %v653, %v652
      %v664 = vpack.c.bf16 %v655, %v654
      %v665 = vpack.c.bf16 %v657, %v656
      %v666 = vld [vmem:[%s2] sm:$0xf]
      %v667 = vld [vmem:[%s2 + $0x4] sm:$0xf]
      %v668 = vld [vmem:[%s2 + $0x8] sm:$0xf]
      %v669 = vld [vmem:[%s2 + $0xc] sm:$0xf]
      %v670 = vld [vmem:[%s237] sm:$0xff]
      %v671 = vld [vmem:[%s237 + $0x8] sm:$0xff]
      %v672 = vld [vmem:[%s237 + $0x10] sm:$0xff]
      %v673 = vld [vmem:[%s237 + $0x18] sm:$0xff]
      %v674 = vld [vmem:[%s237 + $0x20] sm:$0xff]
      %v675 = vld [vmem:[%s237 + $0x28] sm:$0xff]
      %v676 = vld [vmem:[%s237 + $0x30] sm:$0xff]
      %v677 = vld [vmem:[%s237 + $0x38] sm:$0xff]
      %v678 = vld [vmem:[%s237 + $0x40] sm:$0xff]
      %v679 = vld [vmem:[%s237 + $0x48] sm:$0xff]
      %v680 = vld [vmem:[%s237 + $0x50] sm:$0xff]
      %v681 = vld [vmem:[%s237 + $0x58] sm:$0xff]
      %v682 = vld [vmem:[%s237 + $0x60] sm:$0xff]
      %v683 = vld [vmem:[%s237 + $0x68] sm:$0xff]
      %v684 = vld [vmem:[%s237 + $0x70] sm:$0xff]
      %v685 = vld [vmem:[%s237 + $0x78] sm:$0xff]
      %v690 = vunpack.c.l.b16 %v666
      %v691 = vunpack.c.l.b16 %v667
      %v692 = vunpack.c.l.b16 %v668
      %v693 = vunpack.c.l.b16 %v669
      %v694 = vpack.c.b16 %v691, %v690
      %v695 = vpack.c.b16 %v693, %v692
      %vm698 = vcmask 261120
      %v700 = vsel %vm698, %v658, 0
      %v703 = vsel %vm698, %v659, 0
      %v706 = vsel %vm698, %v660, 0
      %v709 = vsel %vm698, %v661, 0
      %v712 = vsel %vm698, %v662, 0
      %v715 = vsel %vm698, %v663, 0
      %v718 = vsel %vm698, %v664, 0
      %v721 = vsel %vm698, %v665, 0
      %723 = vmatprep.subr.bf16.mxu0 0
      %724 = vmatpush1.bf16.msra.mxu0 %v694
      %725 = vmatprep.subr.bf16.mxu0 0
      %726 = vmatpush1.bf16.msra.mxu0 %v695
      %727 = vmatprep.subr.bf16.mxu0 0
      %728 = vmatpush1.bf16.msra.mxu0 0
      %729 = vmatprep.subr.bf16.mxu0 0
      %730 = vmatpush1.bf16.msra.mxu0 0
      %731 = vmatprep.subr.bf16.mxu0 0
      %732 = vmatpush1.bf16.msra.mxu0 0
      %733 = vmatprep.subr.bf16.mxu0 0
      %734 = vmatpush1.bf16.msra.mxu0 0
      %735 = vmatprep.subr.bf16.mxu0 0
      %736 = vmatpush1.bf16.msra.mxu0 0
      %737 = vmatprep.subr.bf16.mxu0 0
      %738 = vmatpush1.bf16.msra.mxu0 0
      %739 = vmatprep.subr.bf16.mxu0 0
      %740 = vmatpush1.bf16.msra.mxu0 0
      %741 = vmatprep.subr.bf16.mxu0 0
      %742 = vmatpush1.bf16.msra.mxu0 0
      %743 = vmatprep.subr.bf16.mxu0 0
      %744 = vmatpush1.bf16.msra.mxu0 0
      %745 = vmatprep.subr.bf16.mxu0 0
      %746 = vmatpush1.bf16.msra.mxu0 0
      %747 = vmatprep.subr.bf16.mxu0 0
      %748 = vmatpush1.bf16.msra.mxu0 0
      %749 = vmatprep.subr.bf16.mxu0 0
      %750 = vmatpush1.bf16.msra.mxu0 0
      %751 = vmatprep.subr.bf16.mxu0 0
      %752 = vmatpush1.bf16.msra.mxu0 0
      %753 = vmatprep.subr.bf16.mxu0 0
      %754 = vmatpush1.bf16.msra.mxu0 0
      %755 = vmatprep.mubr.bf16.mxu0 0
      %756 = vmatmul.mubr.bf16.gmra.mrb[0].mxu0 %v700
      %v757 = vpop.f32.mrb[0].mxu0
      %v758 = vadd.f32 %v670, %v757
      %v759 = vpop.f32.mrb[0].mxu0
      %v760 = vpop.f32.mrb[0].mxu0
      %v761 = vadd.f32 %v671, %v760
      %v762 = vpop.f32.mrb[0].mxu0
      %763 = vmatprep.mubr.bf16.mxu0 0
      %764 = vmatmul.mubr.bf16.gmra.mrb[0].mxu0 %v703
      %v765 = vpop.f32.mrb[0].mxu0
      %v766 = vadd.f32 %v672, %v765
      %v767 = vpop.f32.mrb[0].mxu0
      %v768 = vpop.f32.mrb[0].mxu0
      %v769 = vadd.f32 %v673, %v768
      %v770 = vpop.f32.mrb[0].mxu0
      %771 = vmatprep.mubr.bf16.mxu0 0
      %772 = vmatmul.mubr.bf16.gmra.mrb[0].mxu0 %v706
      %v773 = vpop.f32.mrb[0].mxu0
      %v774 = vadd.f32 %v674, %v773
      %v775 = vpop.f32.mrb[0].mxu0
      %v776 = vpop.f32.mrb[0].mxu0
      %v777 = vadd.f32 %v675, %v776
      %v778 = vpop.f32.mrb[0].mxu0
      %779 = vmatprep.mubr.bf16.mxu0 0
      %780 = vmatmul.mubr.bf16.gmra.mrb[0].mxu0 %v709
      %v781 = vpop.f32.mrb[0].mxu0
      %v782 = vadd.f32 %v676, %v781
      %v783 = vpop.f32.mrb[0].mxu0
      %v784 = vpop.f32.mrb[0].mxu0
      %v785 = vadd.f32 %v677, %v784
      %v786 = vpop.f32.mrb[0].mxu0
      %787 = vmatprep.mubr.bf16.mxu0 0
      %788 = vmatmul.mubr.bf16.gmra.mrb[0].mxu0 %v712
      %v789 = vpop.f32.mrb[0].mxu0
      %v790 = vadd.f32 %v678, %v789
      %v791 = vpop.f32.mrb[0].mxu0
      %v792 = vpop.f32.mrb[0].mxu0
      %v793 = vadd.f32 %v679, %v792
      %v794 = vpop.f32.mrb[0].mxu0
      %795 = vmatprep.mubr.bf16.mxu0 0
      %796 = vmatmul.mubr.bf16.gmra.mrb[0].mxu0 %v715
      %v797 = vpop.f32.mrb[0].mxu0
      %v798 = vadd.f32 %v680, %v797
      %v799 = vpop.f32.mrb[0].mxu0
      %v800 = vpop.f32.mrb[0].mxu0
      %v801 = vadd.f32 %v681, %v800
      %v802 = vpop.f32.mrb[0].mxu0
      %803 = vmatprep.mubr.bf16.mxu0 0
      %804 = vmatmul.mubr.bf16.gmra.mrb[0].mxu0 %v718
      %v805 = vpop.f32.mrb[0].mxu0
      %v806 = vadd.f32 %v682, %v805
      %v807 = vpop.f32.mrb[0].mxu0
      %v808 = vpop.f32.mrb[0].mxu0
      %v809 = vadd.f32 %v683, %v808
      %v810 = vpop.f32.mrb[0].mxu0
      %811 = vmatprep.mubr.bf16.mxu0 0
      %812 = vmatmul.mubr.bf16.gmra.mrb[0].mxu0 %v721
      %v813 = vpop.f32.mrb[0].mxu0
      %v814 = vadd.f32 %v684, %v813
      %v815 = vpop.f32.mrb[0].mxu0
      %v816 = vpop.f32.mrb[0].mxu0
      %v817 = vadd.f32 %v685, %v816
      %v818 = vpop.f32.mrb[0].mxu0
      %819 = vdwg.mxu0
      %v820 = vtanh.pop %v758
      %v821 = vtanh.pop %v761
      %v822 = vtanh.pop %v766
      %v823 = vtanh.pop %v769
      %v824 = vtanh.pop %v774
      %v825 = vtanh.pop %v777
      %v826 = vtanh.pop %v782
      %v827 = vtanh.pop %v785
      %v828 = vtanh.pop %v790
      %v829 = vtanh.pop %v793
      %v830 = vtanh.pop %v798
      %v831 = vtanh.pop %v801
      %v832 = vtanh.pop %v806
      %v833 = vtanh.pop %v809
      %v834 = vtanh.pop %v814
      %v835 = vtanh.pop %v817
      %v836 = vpack.c.bf16 %v821, %v820
      %v837 = vpack.c.bf16 %v823, %v822
      %v838 = vpack.c.bf16 %v825, %v824
      %v839 = vpack.c.bf16 %v827, %v826
      %v840 = vpack.c.bf16 %v829, %v828
      %v841 = vpack.c.bf16 %v831, %v830
      %v842 = vpack.c.bf16 %v833, %v832
      %v843 = vpack.c.bf16 %v835, %v834
      %v844 = vld [vmem:[%s3] sm:$0xf]
      %v845 = vld [vmem:[%s3 + $0x4] sm:$0xf]
      %v846 = vld [vmem:[%s3 + $0x8] sm:$0xf]
      %v847 = vld [vmem:[%s3 + $0xc] sm:$0xf]
      %v848 = vld [vmem:[%s3 + $0x10] sm:$0xf]
      %v849 = vld [vmem:[%s3 + $0x14] sm:$0xf]
      %v850 = vld [vmem:[%s3 + $0x18] sm:$0xf]
      %v851 = vld [vmem:[%s3 + $0x1c] sm:$0xf]
      %v852 = vld [vmem:[%s3 + $0x20] sm:$0xf]
      %v853 = vld [vmem:[%s3 + $0x24] sm:$0xf]
      %v854 = vld [vmem:[%s3 + $0x28] sm:$0xf]
      %v855 = vld [vmem:[%s3 + $0x2c] sm:$0xf]
      %v856 = vld [vmem:[%s3 + $0x30] sm:$0xf]
      %v857 = vld [vmem:[%s3 + $0x34] sm:$0xf]
      %v858 = vld [vmem:[%s3 + $0x38] sm:$0xf]
      %v859 = vld [vmem:[%s3 + $0x3c] sm:$0xf]
      %v860 = vld [vmem:[%s4] sm:$0x1]
      %v862 = vlaneseq
      %v863 = vshrl.u32 %v862, 7
      %v864 = vsub.s32 0, %v863
      %v865 = vrot.slane %v860, %v864
      %v883 = vunpack.c.l.b16 %v844
      %v884 = vunpack.c.l.b16 %v845
      %v885 = vunpack.c.l.b16 %v846
      %v886 = vunpack.c.l.b16 %v847
      %v887 = vunpack.c.l.b16 %v848
      %v888 = vunpack.c.l.b16 %v849
      %v889 = vunpack.c.l.b16 %v850
      %v890 = vunpack.c.l.b16 %v851
      %v891 = vunpack.c.l.b16 %v852
      %v892 = vunpack.c.l.b16 %v853
      %v893 = vunpack.c.l.b16 %v854
      %v894 = vunpack.c.l.b16 %v855
      %v895 = vunpack.c.l.b16 %v856
      %v896 = vunpack.c.l.b16 %v857
      %v897 = vunpack.c.l.b16 %v858
      %v898 = vunpack.c.l.b16 %v859
      %v899 = vpack.c.b16 %v884, %v883
      %v900 = vpack.c.b16 %v886, %v885
      %v901 = vpack.c.b16 %v888, %v887
      %v902 = vpack.c.b16 %v890, %v889
      %v903 = vpack.c.b16 %v892, %v891
      %v904 = vpack.c.b16 %v894, %v893
      %v905 = vpack.c.b16 %v896, %v895
      %v906 = vpack.c.b16 %v898, %v897
      %915 = vmatprep.subr.bf16.mxu0 0
      %916 = vmatpush1.bf16.msra.mxu0 %v899
      %917 = vmatprep.subr.bf16.mxu0 0
      %918 = vmatpush1.bf16.msra.mxu0 %v900
      %919 = vmatprep.subr.bf16.mxu0 0
      %920 = vmatpush1.bf16.msra.mxu0 %v901
      %921 = vmatprep.subr.bf16.mxu0 0
      %922 = vmatpush1.bf16.msra.mxu0 %v902
      %923 = vmatprep.subr.bf16.mxu0 0
      %924 = vmatpush1.bf16.msra.mxu0 %v903
      %925 = vmatprep.subr.bf16.mxu0 0
      %926 = vmatpush1.bf16.msra.mxu0 %v904
      %927 = vmatprep.subr.bf16.mxu0 0
      %928 = vmatpush1.bf16.msra.mxu0 %v905
      %929 = vmatprep.subr.bf16.mxu0 0
      %930 = vmatpush1.bf16.msra.mxu0 %v906
      %931 = vmatprep.subr.bf16.mxu0 0
      %932 = vmatpush1.bf16.msra.mxu0 0
      %933 = vmatprep.subr.bf16.mxu0 0
      %934 = vmatpush1.bf16.msra.mxu0 0
      %935 = vmatprep.subr.bf16.mxu0 0
      %936 = vmatpush1.bf16.msra.mxu0 0
      %937 = vmatprep.subr.bf16.mxu0 0
      %938 = vmatpush1.bf16.msra.mxu0 0
      %939 = vmatprep.subr.bf16.mxu0 0
      %940 = vmatpush1.bf16.msra.mxu0 0
      %941 = vmatprep.subr.bf16.mxu0 0
      %942 = vmatpush1.bf16.msra.mxu0 0
      %943 = vmatprep.subr.bf16.mxu0 0
      %944 = vmatpush1.bf16.msra.mxu0 0
      %945 = vmatprep.subr.bf16.mxu0 0
      %946 = vmatpush1.bf16.msra.mxu0 0
      %947 = vmatprep.mubr.bf16.mxu0 0
      %948 = vmatmul.mubr.bf16.gmra.mrb[0].mxu0 %v836
      %v949 = vpop.f32.mrb[0].mxu0
      %v950 = vadd.f32 %v865, %v949
      %v951 = vpop.f32.mrb[0].mxu0
      %v952 = vpop.f32.mrb[0].mxu0
      %v953 = vadd.f32 %v865, %v952
      %v954 = vpop.f32.mrb[0].mxu0
      %955 = vmatprep.mubr.bf16.mxu0 0
      %956 = vmatmul.mubr.bf16.gmra.mrb[0].mxu0 %v837
      %v957 = vpop.f32.mrb[0].mxu0
      %v958 = vadd.f32 %v865, %v957
      %v959 = vpop.f32.mrb[0].mxu0
      %v960 = vpop.f32.mrb[0].mxu0
      %v961 = vadd.f32 %v865, %v960
      %v962 = vpop.f32.mrb[0].mxu0
      %963 = vmatprep.mubr.bf16.mxu0 0
      %964 = vmatmul.mubr.bf16.gmra.mrb[0].mxu0 %v838
      %v965 = vpop.f32.mrb[0].mxu0
      %v966 = vadd.f32 %v865, %v965
      %v967 = vpop.f32.mrb[0].mxu0
      %v968 = vpop.f32.mrb[0].mxu0
      %v969 = vadd.f32 %v865, %v968
      %v970 = vpop.f32.mrb[0].mxu0
      %971 = vmatprep.mubr.bf16.mxu0 0
      %972 = vmatmul.mubr.bf16.gmra.mrb[0].mxu0 %v839
      %v973 = vpop.f32.mrb[0].mxu0
      %v974 = vadd.f32 %v865, %v973
      %v975 = vpop.f32.mrb[0].mxu0
      %v976 = vpop.f32.mrb[0].mxu0
      %v977 = vadd.f32 %v865, %v976
      %v978 = vpop.f32.mrb[0].mxu0
      %979 = vmatprep.mubr.bf16.mxu0 0
      %980 = vmatmul.mubr.bf16.gmra.mrb[0].mxu0 %v840
      %v981 = vpop.f32.mrb[0].mxu0
      %v982 = vadd.f32 %v865, %v981
      %v983 = vpop.f32.mrb[0].mxu0
      %v984 = vpop.f32.mrb[0].mxu0
      %v985 = vadd.f32 %v865, %v984
      %v986 = vpop.f32.mrb[0].mxu0
      %987 = vmatprep.mubr.bf16.mxu0 0
      %988 = vmatmul.mubr.bf16.gmra.mrb[0].mxu0 %v841
      %v989 = vpop.f32.mrb[0].mxu0
      %v990 = vadd.f32 %v865, %v989
      %v991 = vpop.f32.mrb[0].mxu0
      %v992 = vpop.f32.mrb[0].mxu0
      %v993 = vadd.f32 %v865, %v992
      %v994 = vpop.f32.mrb[0].mxu0
      %995 = vmatprep.mubr.bf16.mxu0 0
      %996 = vmatmul.mubr.bf16.gmra.mrb[0].mxu0 %v842
      %v997 = vpop.f32.mrb[0].mxu0
      %v998 = vadd.f32 %v865, %v997
      %v999 = vpop.f32.mrb[0].mxu0
      %v1000 = vpop.f32.mrb[0].mxu0
      %v1001 = vadd.f32 %v865, %v1000
      %v1002 = vpop.f32.mrb[0].mxu0
      %1003 = vmatprep.mubr.bf16.mxu0 0
      %1004 = vmatmul.mubr.bf16.gmra.mrb[0].mxu0 %v843
      %v1005 = vpop.f32.mrb[0].mxu0
      %v1006 = vadd.f32 %v865, %v1005
      %v1007 = vpop.f32.mrb[0].mxu0
      %v1008 = vpop.f32.mrb[0].mxu0
      %v1009 = vadd.f32 %v865, %v1008
      %v1010 = vpop.f32.mrb[0].mxu0
      %1011 = vdwg.mxu0
      %v1012 = vmul.f32 %v392, %v258
      %v1013 = vmul.f32 %v399, %v259
      %v1014 = vmul.f32 %v406, %v260
      %v1015 = vmul.f32 %v413, %v261
      %v1016 = vmul.f32 %v420, %v262
      %v1017 = vmul.f32 %v427, %v263
      %v1018 = vmul.f32 %v434, %v264
      %v1019 = vmul.f32 %v441, %v265
      %v1020 = vmul.f32 %v448, %v266
      %v1021 = vmul.f32 %v455, %v267
      %v1022 = vmul.f32 %v462, %v268
      %v1023 = vmul.f32 %v469, %v269
      %v1024 = vmul.f32 %v476, %v270
      %v1025 = vmul.f32 %v483, %v271
      %v1026 = vmul.f32 %v490, %v272
      %v1027 = vmul.f32 %v497, %v273
      %v1028 = vmul.f32 %v504, %v242
      %v1029 = vmul.f32 %v511, %v243
      %v1030 = vmul.f32 %v518, %v244
      %v1031 = vmul.f32 %v525, %v245
      %v1032 = vmul.f32 %v532, %v246
      %v1033 = vmul.f32 %v539, %v247
      %v1034 = vmul.f32 %v546, %v248
      %v1035 = vmul.f32 %v553, %v249
      %v1036 = vmul.f32 %v560, %v250
      %v1037 = vmul.f32 %v567, %v251
      %v1038 = vmul.f32 %v574, %v252
      %v1039 = vmul.f32 %v581, %v253
      %v1040 = vmul.f32 %v588, %v254
      %v1041 = vmul.f32 %v595, %v255
      %v1042 = vmul.f32 %v602, %v256
      %v1043 = vmul.f32 %v609, %v257
      %v1044 = vsub.f32 %v1012, %v1028
      %v1045 = vsub.f32 %v1013, %v1029
      %v1046 = vsub.f32 %v1014, %v1030
      %v1047 = vsub.f32 %v1015, %v1031
      %v1048 = vsub.f32 %v1016, %v1032
      %v1049 = vsub.f32 %v1017, %v1033
      %v1050 = vsub.f32 %v1018, %v1034
      %v1051 = vsub.f32 %v1019, %v1035
      %v1052 = vsub.f32 %v1020, %v1036
      %v1053 = vsub.f32 %v1021, %v1037
      %v1054 = vsub.f32 %v1022, %v1038
      %v1055 = vsub.f32 %v1023, %v1039
      %v1056 = vsub.f32 %v1024, %v1040
      %v1057 = vsub.f32 %v1025, %v1041
      %v1058 = vsub.f32 %v1026, %v1042
      %v1059 = vsub.f32 %v1027, %v1043
      %v1060 = vsub.f32 %v950, %v1044
      %v1061 = vsub.f32 %v953, %v1045
      %v1062 = vsub.f32 %v958, %v1046
      %v1063 = vsub.f32 %v961, %v1047
      %v1064 = vsub.f32 %v966, %v1048
      %v1065 = vsub.f32 %v969, %v1049
      %v1066 = vsub.f32 %v974, %v1050
      %v1067 = vsub.f32 %v977, %v1051
      %v1068 = vsub.f32 %v982, %v1052
      %v1069 = vsub.f32 %v985, %v1053
      %v1070 = vsub.f32 %v990, %v1054
      %v1071 = vsub.f32 %v993, %v1055
      %v1072 = vsub.f32 %v998, %v1056
      %v1073 = vsub.f32 %v1001, %v1057
      %v1074 = vsub.f32 %v1006, %v1058
      %v1075 = vsub.f32 %v1009, %v1059
      %v1076 = vmin.f32 %v291, 5.0
      %v1077 = vmin.f32 %v293, 5.0
      %v1078 = vmin.f32 %v295, 5.0
      %v1079 = vmin.f32 %v297, 5.0
      %v1080 = vmin.f32 %v299, 5.0
      %v1081 = vmin.f32 %v301, 5.0
      %v1082 = vmin.f32 %v303, 5.0
      %v1083 = vmin.f32 %v305, 5.0
      %v1084 = vmin.f32 %v307, 5.0
      %v1085 = vmin.f32 %v309, 5.0
      %v1086 = vmin.f32 %v311, 5.0
      %v1087 = vmin.f32 %v313, 5.0
      %v1088 = vmin.f32 %v315, 5.0
      %v1089 = vmin.f32 %v317, 5.0
      %v1090 = vmin.f32 %v319, 5.0
      %v1091 = vmin.f32 %v321, 5.0
      %v1092 = vmul.f32 %v1076, %v339
      %v1093 = vmul.f32 %v1077, %v341
      %v1094 = vmul.f32 %v1078, %v343
      %v1095 = vmul.f32 %v1079, %v345
      %v1096 = vmul.f32 %v1080, %v347
      %v1097 = vmul.f32 %v1081, %v349
      %v1098 = vmul.f32 %v1082, %v351
      %v1099 = vmul.f32 %v1083, %v353
      %v1100 = vmul.f32 %v1084, %v355
      %v1101 = vmul.f32 %v1085, %v357
      %v1102 = vmul.f32 %v1086, %v359
      %v1103 = vmul.f32 %v1087, %v361
      %v1104 = vmul.f32 %v1088, %v363
      %v1105 = vmul.f32 %v1089, %v365
      %v1106 = vmul.f32 %v1090, %v367
      %v1107 = vmul.f32 %v1091, %v369
      %v1108 = vmul.f32 %v1060, %v1060
      %v1109 = vmul.f32 %v1061, %v1061
      %v1110 = vmul.f32 %v1062, %v1062
      %v1111 = vmul.f32 %v1063, %v1063
      %v1112 = vmul.f32 %v1064, %v1064
      %v1113 = vmul.f32 %v1065, %v1065
      %v1114 = vmul.f32 %v1066, %v1066
      %v1115 = vmul.f32 %v1067, %v1067
      %v1116 = vmul.f32 %v1068, %v1068
      %v1117 = vmul.f32 %v1069, %v1069
      %v1118 = vmul.f32 %v1070, %v1070
      %v1119 = vmul.f32 %v1071, %v1071
      %v1120 = vmul.f32 %v1072, %v1072
      %v1121 = vmul.f32 %v1073, %v1073
      %v1122 = vmul.f32 %v1074, %v1074
      %v1123 = vmul.f32 %v1075, %v1075
      %v1124 = vmul.f32 %v1108, %v1092
      %v1125 = vmul.f32 %v1109, %v1093
      %v1126 = vmul.f32 %v1110, %v1094
      %v1127 = vmul.f32 %v1111, %v1095
      %v1128 = vmul.f32 %v1112, %v1096
      %v1129 = vmul.f32 %v1113, %v1097
      %v1130 = vmul.f32 %v1114, %v1098
      %v1131 = vmul.f32 %v1115, %v1099
      %v1132 = vmul.f32 %v1116, %v1100
      %v1133 = vmul.f32 %v1117, %v1101
      %v1134 = vmul.f32 %v1118, %v1102
      %v1135 = vmul.f32 %v1119, %v1103
      %v1136 = vmul.f32 %v1120, %v1104
      %v1137 = vmul.f32 %v1121, %v1105
      %v1138 = vmul.f32 %v1122, %v1106
      %v1139 = vmul.f32 %v1123, %v1107
      %v1140 = vsel %vm698, %v1124, 0.0
      %1141 = vadd.xlane.f32.xlu0 %v1140
      %v1142 = vpop.xlane.xlu0 %1141
      %v1143 = vsel %vm698, %v1125, 0.0
      %1144 = vadd.xlane.f32.xlu0 %v1143
      %v1145 = vpop.xlane.xlu0 %1144
      %v1146 = vsel %vm698, %v1126, 0.0
      %1147 = vadd.xlane.f32.xlu0 %v1146
      %v1148 = vpop.xlane.xlu0 %1147
      %v1149 = vsel %vm698, %v1127, 0.0
      %1150 = vadd.xlane.f32.xlu0 %v1149
      %v1151 = vpop.xlane.xlu0 %1150
      %v1152 = vsel %vm698, %v1128, 0.0
      %1153 = vadd.xlane.f32.xlu0 %v1152
      %v1154 = vpop.xlane.xlu0 %1153
      %v1155 = vsel %vm698, %v1129, 0.0
      %1156 = vadd.xlane.f32.xlu0 %v1155
      %v1157 = vpop.xlane.xlu0 %1156
      %v1158 = vsel %vm698, %v1130, 0.0
      %1159 = vadd.xlane.f32.xlu0 %v1158
      %v1160 = vpop.xlane.xlu0 %1159
      %v1161 = vsel %vm698, %v1131, 0.0
      %1162 = vadd.xlane.f32.xlu0 %v1161
      %v1163 = vpop.xlane.xlu0 %1162
      %v1164 = vsel %vm698, %v1132, 0.0
      %1165 = vadd.xlane.f32.xlu0 %v1164
      %v1166 = vpop.xlane.xlu0 %1165
      %v1167 = vsel %vm698, %v1133, 0.0
      %1168 = vadd.xlane.f32.xlu0 %v1167
      %v1169 = vpop.xlane.xlu0 %1168
      %v1170 = vsel %vm698, %v1134, 0.0
      %1171 = vadd.xlane.f32.xlu0 %v1170
      %v1172 = vpop.xlane.xlu0 %1171
      %v1173 = vsel %vm698, %v1135, 0.0
      %1174 = vadd.xlane.f32.xlu0 %v1173
      %v1175 = vpop.xlane.xlu0 %1174
      %v1176 = vsel %vm698, %v1136, 0.0
      %1177 = vadd.xlane.f32.xlu0 %v1176
      %v1178 = vpop.xlane.xlu0 %1177
      %v1179 = vsel %vm698, %v1137, 0.0
      %1180 = vadd.xlane.f32.xlu0 %v1179
      %v1181 = vpop.xlane.xlu0 %1180
      %v1182 = vsel %vm698, %v1138, 0.0
      %1183 = vadd.xlane.f32.xlu0 %v1182
      %v1184 = vpop.xlane.xlu0 %1183
      %v1185 = vsel %vm698, %v1139, 0.0
      %1186 = vadd.xlane.f32.xlu0 %v1185
      %v1187 = vpop.xlane.xlu0 %1186
      %v1188 = vadd.f32 %v1142, %v1145
      %v1189 = vadd.f32 %v1188, %v1148
      %v1190 = vadd.f32 %v1189, %v1151
      %v1191 = vadd.f32 %v1190, %v1154
      %v1192 = vadd.f32 %v1191, %v1157
      %v1193 = vadd.f32 %v1192, %v1160
      %v1194 = vadd.f32 %v1193, %v1163
      %v1195 = vadd.f32 %v1194, %v1166
      %v1196 = vadd.f32 %v1195, %v1169
      %v1197 = vadd.f32 %v1196, %v1172
      %v1198 = vadd.f32 %v1197, %v1175
      %v1199 = vadd.f32 %v1198, %v1178
      %v1200 = vadd.f32 %v1199, %v1181
      %v1201 = vadd.f32 %v1200, %v1184
      %v1202 = vadd.f32 %v1201, %v1187
      %v1203 = vrot.slane %v1202, 4
      %v1204 = vadd.f32 %v1202, %v1203
      %v1205 = vrot.slane %v1204, 2
      %v1206 = vadd.f32 %v1204, %v1205
      %v1207 = vrot.slane %v1206, 1
      %v1208 = vadd.f32 %v1206, %v1207
      %v1209 = vmul.f32 %v1208, 0.00012207031
      %vm1210 = vcmask 0
      %1211 = vst.msk [vmem:[%s240] sm:$0x1] %vm1210, %v1209
      %p1212 = scmp.lt.s32.totalorder %s16, 1
      %s1213 = scalar_select %p1212, %s16, 1
      %s1214 = scalar_lea.vmem %s5, %s1213
      // Predicated region
      $region41: #{tpu_custom_call.1} parent=39 // pred_check
        %p1215 = pneg %p149
      $region42: #{tpu_custom_call.1} parent=39 // pred_check_branch
        %1217 = sbr.rel (%p1215) target = $region44
      $region43: #{tpu_custom_call.1} parent=39 // pred_region
        _
      $region44: #{tpu_custom_call.1} parent=39 // pred_fallthru
        _
    $region40: #{tpu_custom_call.1} parent=5 // pred_fallthru
      _
    %p1218 = scmp.le.s32.totalorder 2, %s11
    // Predicated region
    $region45: #{tpu_custom_call.1} parent=5 // pred_check
      %p1219 = pneg %p1218
    $region46: #{tpu_custom_call.1} parent=5 // pred_check_branch
      %1221 = sbr.rel (%p1219) target = $region48
    $region47: #{tpu_custom_call.1} parent=5 // pred_region
      %s1222 = ssub.s32 %s11, 2
      // Predicated region
      $region49: #{tpu_custom_call.1} parent=47 // pred_check
        %p1223 = pneg %p155
      $region50: #{tpu_custom_call.1} parent=47 // pred_check_branch
        %1225 = sbr.rel (%p1223) target = $region52
      $region51: #{tpu_custom_call.1} parent=47 // pred_region
        %p1226 = scmp.lt.s32.totalorder %s17, 1
        %s1227 = scalar_select %p1226, %s17, 1
        %s1228 = scalar_lea.vmem %s5, %s1227
      $region52: #{tpu_custom_call.1} parent=47 // pred_fallthru
        _
    $region48: #{tpu_custom_call.1} parent=5 // pred_fallthru
      _
  $region6: #{tpu_custom_call.1} parent=0 // loop_footer
    %s15 = sadd.s32 1, %s11
  $region7: #{tpu_custom_call.1} parent=0 // loop_footer_branch
    %10 = sbr.rel target = $region3
  $region8: #{tpu_custom_call.1} parent=0 // loop_exit
    _

</llo_original>
